<compile_context>
chip_gen: v7x
topology: tpu7x:2x2x1
jax: 0.10.0
libtpu: 0.0.40
codegen_flags: <defaults>
</compile_context>

<pallas_src>
import jax
import jax.numpy as jnp
from jax.experimental import pallas as pl
from jax.experimental.pallas import tpu as pltpu


def _bd_loss_kernel(net_ref, bnd_ref, acc_ref):
    # net_ref / bnd_ref: (C, TN) VMEM tiles (batch dim squeezed).
    # acc_ref: (1, TN) f32 output block, resident across the n (reduction) axis.
    @pl.when(pl.program_id(1) == 0)
    def _():
        acc_ref[...] = jnp.zeros_like(acc_ref)

    x = net_ref[...].astype(jnp.float32)                    # (C, TN)
    x_max = jnp.max(x, axis=0, keepdims=True)               # (1, TN)
    e_x = jnp.exp(x - x_max)                                # (C, TN)
    den = jnp.sum(e_x, axis=0, keepdims=True)               # (1, TN)

    dc = bnd_ref[...].astype(jnp.float32)                   # (C, TN)
    # numerator only over foreground channels (drop channel 0)
    num = jnp.sum(e_x[1:, :] * dc[1:, :], axis=0, keepdims=True)  # (1, TN)

    # exact division (keeps 1e-5 rtol); lane-parallel accumulate in f32
    acc_ref[...] += num / den


def _default_tile_n(C, N):
    # Cap a single (C, tile_n) f32 input block at ~4 MiB so
    # 2 inputs x 2 pipeline buffers + output stay well under the default scoped
    # VMEM limit on all chips (v7x has half the VMEM of v5e/v6e).
    cap_bytes = 4 << 20
    cap_lanes = max(128, (cap_bytes // (4 * C)) // 128 * 128)
    cap_lanes = min(cap_lanes, 65536)
    n_rounded = pl.cdiv(N, 128) * 128
    return int(min(cap_lanes, n_rounded))


def bd_loss(net_output, target, bound, *, tile_n=None):
    """net_output, bound: (B, C, X, Y, Z). target accepted for API parity (unused)."""
    del target  # not used by BDLoss.forward
    B, C, X, Y, Z = net_output.shape
    N = X * Y * Z

    if tile_n is None:
        tile_n = _default_tile_n(C, N)
    assert tile_n % 128 == 0, "tile_n must be a multiple of 128"

    net_flat = net_output.reshape(B, C, N)
    bnd_flat = bound.reshape(B, C, N)

    # Zero-pad the lane axis up to a multiple of tile_n. Padded lanes contribute
    # exactly zero: bound pad is 0 so num=0 there, and den stays finite.
    n_pad = pl.cdiv(N, tile_n) * tile_n
    if n_pad != N:
        pad = n_pad - N
        net_flat = jnp.pad(net_flat, ((0, 0), (0, 0), (0, pad)))
        bnd_flat = jnp.pad(bnd_flat, ((0, 0), (0, 0), (0, pad)))

    grid = (B, n_pad // tile_n)

    partial = pl.pallas_call(
        _bd_loss_kernel,
        out_shape=jax.ShapeDtypeStruct((B, 1, tile_n), jnp.float32),
        grid_spec=pltpu.PrefetchScalarGridSpec(
            num_scalar_prefetch=0,
            grid=grid,
            in_specs=[
                pl.BlockSpec((None, C, tile_n), lambda b, n: (b, 0, n)),
                pl.BlockSpec((None, C, tile_n), lambda b, n: (b, 0, n)),
            ],
            # Per-batch lane-dense partial sums; same block across the n axis
            # => acts as a VMEM-resident accumulator.
            out_specs=pl.BlockSpec((None, 1, tile_n), lambda b, n: (b, 0, 0)),
        ),
        compiler_params=pltpu.CompilerParams(
            dimension_semantics=("parallel", "arbitrary"),
        ),
    )(net_flat, bnd_flat)

    # mean over the (B, C-1, X, Y, Z) "multipled" tensor
    denom = jnp.float32(B * (C - 1) * N)
    return jnp.sum(partial) / denom


def bd_loss_ref(net_output, target, bound):
    del target
    x = net_output.astype(jnp.float32)
    sm = jax.nn.softmax(x, axis=1)
    pc = sm[:, 1:, ...]
    dc = bound[:, 1:, ...].astype(jnp.float32)
    return jnp.mean(pc * dc)


if __name__ == "__main__":
    B, C, X, Y, Z = 2, 4, 8, 8, 8   # N = 512 spatial lanes per batch
    key = jax.random.PRNGKey(0)
    k1, k2, k3 = jax.random.split(key, 3)

    net_output = jax.random.normal(k1, (B, C, X, Y, Z), dtype=jnp.float32)
    target = jax.random.randint(k2, (B, 1, X, Y, Z), 0, C).astype(jnp.float32)
    bound = jax.random.normal(k3, (B, C, X, Y, Z), dtype=jnp.float32)

    out = bd_loss(net_output, target, bound)
    out = jax.block_until_ready(out)

    ref = bd_loss_ref(net_output, target, bound)
    assert jnp.allclose(out, ref, rtol=1e-5, atol=1e-6), (out, ref)
    print("KERNEL_OK")
</pallas_src>

<mosaic_0001>
module attributes {stable_mosaic.version = 11 : i64} {
  func.func @_bd_loss_kernel(%arg0: i32, %arg1: i32, %arg2: memref<1x4x512xf32, #tpu.memory_space<vmem>>, %arg3: memref<1x4x512xf32, #tpu.memory_space<vmem>>, %arg4: memref<1x1x512xf32, #tpu.memory_space<vmem>>) attributes {dimension_semantics = [#tpu.dimension_semantics<parallel>, #tpu.dimension_semantics<arbitrary>], iteration_bounds = array<i64: 2, 1>, scalar_prefetch = 0 : i64, scratch_operands = 0 : i64, tpu.core_type = #tpu.core_type<tc>, window_params = [{transform_indices = @transform_0, window_bounds = array<i64: 1, 4, 512>}, {transform_indices = @transform_1, window_bounds = array<i64: 1, 4, 512>}, {transform_indices = @transform_2, window_bounds = array<i64: 1, 1, 512>}]} {
    %c0_i32 = arith.constant 0 : i32
    %0 = arith.cmpi eq, %arg1, %c0_i32 : i32
    %1 = arith.extui %0 : i1 to i32
    %c0_i32_0 = arith.constant 0 : i32
    %2 = arith.cmpi ne, %1, %c0_i32_0 : i32
    scf.if %2 {
      %cst_14 = arith.constant 0.000000e+00 : f32
      %26 = vector.broadcast %cst_14 : f32 to vector<1x512xf32>
      %c0_15 = arith.constant 0 : index
      %c0_16 = arith.constant 0 : index
      %c0_17 = arith.constant 0 : index
      %27 = vector.load %arg4[%c0_15, %c0_16, %c0_17] : memref<1x1x512xf32, #tpu.memory_space<vmem>>, vector<1x1x512xf32>
      %28 = vector.shape_cast %27 : vector<1x1x512xf32> to vector<1x512xf32>
      %29 = vector.shape_cast %26 : vector<1x512xf32> to vector<1x1x512xf32>
      tpu.vector_store %arg4[%c0_15, %c0_16, %c0_17], %29 {strides = array<i32>} : memref<1x1x512xf32, #tpu.memory_space<vmem>>, vector<1x1x512xf32>,
    } else {
    }
    %c0 = arith.constant 0 : index
    %c0_1 = arith.constant 0 : index
    %c0_2 = arith.constant 0 : index
    %3 = vector.load %arg2[%c0, %c0_1, %c0_2] : memref<1x4x512xf32, #tpu.memory_space<vmem>>, vector<1x4x512xf32>
    %4 = vector.shape_cast %3 : vector<1x4x512xf32> to vector<4x512xf32>
    %cst = arith.constant dense<0xFF800000> : vector<512xf32>
    %5 = vector.multi_reduction <maximumf>, %4, %cst [0] : vector<4x512xf32> to vector<512xf32>
    %6 = vector.shape_cast %5 : vector<512xf32> to vector<1x512xf32>
    %7 = vector.broadcast %6 : vector<1x512xf32> to vector<4x512xf32>
    %8 = arith.subf %4, %7 : vector<4x512xf32>
    %9 = math.exp %8 : vector<4x512xf32>
    %cst_3 = arith.constant dense<0.000000e+00> : vector<512xf32>
    %10 = vector.multi_reduction <add>, %9, %cst_3 [0] : vector<4x512xf32> to vector<512xf32>
    %11 = vector.shape_cast %10 : vector<512xf32> to vector<1x512xf32>
    %c0_4 = arith.constant 0 : index
    %c0_5 = arith.constant 0 : index
    %c0_6 = arith.constant 0 : index
    %12 = vector.load %arg3[%c0_4, %c0_5, %c0_6] : memref<1x4x512xf32, #tpu.memory_space<vmem>>, vector<1x4x512xf32>
    %13 = vector.shape_cast %12 : vector<1x4x512xf32> to vector<4x512xf32>
    %14 = vector.extract_strided_slice %9 {offsets = [1, 0], sizes = [3, 512], strides = [1, 1]} : vector<4x512xf32> to vector<3x512xf32>
    %15 = vector.extract_strided_slice %13 {offsets = [1, 0], sizes = [3, 512], strides = [1, 1]} : vector<4x512xf32> to vector<3x512xf32>
    %16 = arith.mulf %14, %15 : vector<3x512xf32>
    %cst_7 = arith.constant dense<0.000000e+00> : vector<512xf32>
    %17 = vector.multi_reduction <add>, %16, %cst_7 [0] : vector<3x512xf32> to vector<512xf32>
    %18 = vector.shape_cast %17 : vector<512xf32> to vector<1x512xf32>
    %c0_8 = arith.constant 0 : index
    %c0_9 = arith.constant 0 : index
    %c0_10 = arith.constant 0 : index
    %19 = vector.load %arg4[%c0_8, %c0_9, %c0_10] : memref<1x1x512xf32, #tpu.memory_space<vmem>>, vector<1x1x512xf32>
    %20 = vector.shape_cast %19 : vector<1x1x512xf32> to vector<1x512xf32>
    %21 = arith.divf %18, %11 : vector<1x512xf32>
    %22 = arith.addf %20, %21 : vector<1x512xf32>
    %c0_11 = arith.constant 0 : index
    %c0_12 = arith.constant 0 : index
    %c0_13 = arith.constant 0 : index
    %23 = vector.load %arg4[%c0_11, %c0_12, %c0_13] : memref<1x1x512xf32, #tpu.memory_space<vmem>>, vector<1x1x512xf32>
    %24 = vector.shape_cast %23 : vector<1x1x512xf32> to vector<1x512xf32>
    %25 = vector.shape_cast %22 : vector<1x512xf32> to vector<1x1x512xf32>
    tpu.vector_store %arg4[%c0_11, %c0_12, %c0_13], %25 {strides = array<i32>} : memref<1x1x512xf32, #tpu.memory_space<vmem>>, vector<1x1x512xf32>,
    return
  }
  func.func @transform_0(%arg0: i32, %arg1: i32) -> (i32, i32, i32) {
    %c0_i32 = arith.constant 0 : i32
    %c0_i32_0 = arith.constant 0 : i32
    return %arg0, %c0_i32, %arg1 : i32, i32, i32
  }
  func.func @transform_1(%arg0: i32, %arg1: i32) -> (i32, i32, i32) {
    %c0_i32 = arith.constant 0 : i32
    %c0_i32_0 = arith.constant 0 : i32
    return %arg0, %c0_i32, %arg1 : i32, i32, i32
  }
  func.func @transform_2(%arg0: i32, %arg1: i32) -> (i32, i32, i32) {
    %c0_i32 = arith.constant 0 : i32
    %c0_i32_0 = arith.constant 0 : i32
    %c0_i32_1 = arith.constant 0 : i32
    return %arg0, %c0_i32, %c0_i32_0 : i32, i32, i32
  }
}

</mosaic_0001>

<llo_original>
// kernel: tpu_custom_call.1
$region0: #{tpu_custom_call.1}
  #allocation0 [shape = 'u32[]', space=smem, size = 0x4, offset = 0x4, fixed_abs, tag = 'smem constant byte address 0x4 - core index']
  #allocation1 [shape = 'u32[144,128]{1,0:T(1,128)}', space=vmem, size = 0x12000, scoped, tag = 'internal scratch']
  %s0 = inlined_call_operand.hbm [shape: f32[2,4,512], index: 0, kind: input, shape index: {}]
  %s1 = inlined_call_operand.hbm [shape: f32[2,4,512], index: 1, kind: input, shape index: {}]
  %s2 = inlined_call_operand.hbm [shape: f32[2,1,512], index: 2, kind: output, shape index: {}]
  %s3 = sld [smem:[#allocation0]]
  $region53: #{tpu_custom_call.1} parent=0
    _
  %s5 = ssub.s32 1, %s3
  %s6 = scalar_select 0, %s5, %s3
  $region1: #{tpu_custom_call.1} parent=0
    #allocation2 [shape = 'u8[16384]{0}', space=vmem, size = 0x4000, scoped, tag = 'input window, operand 0']
    #allocation3 [shape = 's32[2]{0}', space=sflag, size = 0x8, scoped, tag = 'scoped memory for tpu_custom_call.1']
    #allocation4 [shape = 's32[2]{0}', space=sflag, size = 0x8, scoped, tag = 'scoped memory for tpu_custom_call.1']
    #allocation5 [shape = 'u8[16384]{0}', space=vmem, size = 0x4000, scoped, tag = 'input window, operand 1']
    #allocation6 [shape = 's32[2]{0}', space=sflag, size = 0x8, scoped, tag = 'scoped memory for tpu_custom_call.1']
    #allocation7 [shape = 'u8[4096]{0}', space=vmem, size = 0x1000, scoped, tag = 'output window, operand 0']
    %7 = vsyncpa [#allocation3], 0
    %s8 = scalar_lea.sflag [#allocation3], 1
    %9 = vsyncpa %s8, 0
    %10 = vsyncpa [#allocation6], 0
    %s11 = scalar_lea.sflag [#allocation6], 1
    %12 = vsyncpa %s11, 0
    %13 = vsyncpa [#allocation4], 0
    %s14 = scalar_lea.sflag [#allocation4], 1
    %15 = vsyncpa %s14, 0
    loop: start=0, step=1, limit=4
    $region2: #{tpu_custom_call.1} parent=1 // loop_pre_header
      _
    $region3: #{tpu_custom_call.1} parent=1 // loop_header
      %s17 = sphi 0, %s21
      %p18 = scmp.ge.s32.totalorder %s17, 4
      %s24 = sphi 0, %s36
      %s25 = sphi 0, %s32
      %s26 = sphi 0, %s24
      %s27 = sphi 0, %s25
      %s28 = sphi 0, %s26
      %s29 = sphi 0, %s27
      %s41 = sphi 0, %s43
      %s44 = sphi 0, %s41
      %s45 = sphi 0, %s44
      %s61 = sphi 0, %s45
      %s69 = sphi 0, %s71
      %s72 = sphi 0, %s69
      %s73 = sphi 0, %s72
      %s89 = sphi 0, %s73
      %s95 = sphi 0, %s97
      %s98 = sphi 0, %s95
      %s99 = sphi 0, %s98
      %s115 = sphi 0, %s99
    $region4: #{tpu_custom_call.1} parent=1 // loop_header_branch
      %20 = sbr.rel (%p18) target = $region8
    $region5: #{tpu_custom_call.1} parent=1 // loop_body
      %s22 = ssub.s32 %s17, 1
      %s23 = ssub.s32 %s17, 2
      %s30 = sadd.s32 1, %s25
      %p31 = scmp.ge.s32.totalorder %s30, 1
      %s32 = scalar_select %p31, 0, %s30
      %s33 = sadd.s32 1, %s24
      %s34 = scalar_select %p31, %s33, %s24
      %p35 = scmp.ge.s32.totalorder %s34, 2
      %s36 = scalar_select %p35, 0, %s34
      %s37 = ssub.s32 %s24, %s36
      %s38 = ssub.s32 %s25, %s32
      %s39 = sor.u32 %s37, %s38
      %p40 = scmp.eq.s32.totalorder %s39, 0
      %s42 = sadd.s32 %s41, 1
      %s43 = scalar_select %p40, %s41, %s42
      %p46 = pneg %p40
      %p47 = scmp.eq.s32.totalorder %s17, 1
      %p48 = por %p46, %p47
      %p49 = scmp.ne.s32.totalorder %s41, %s44
      %p50 = scmp.eq.s32.totalorder %s17, 0
      %p51 = por %p49, %p50
      %p52 = scmp.ne.s32.totalorder %s41, %s44
      %p53 = scmp.eq.s32.totalorder %s22, 1
      %p54 = por %p52, %p53
      %p55 = scmp.ne.s32.totalorder %s44, %s45
      %p56 = scmp.eq.s32.totalorder %s22, 0
      %p57 = por %p55, %p56
      %p58 = scmp.ne.s32.totalorder %s44, %s45
      %p59 = scmp.eq.s32.totalorder %s23, 1
      %p60 = por %p58, %p59
      %p62 = scmp.ne.s32.totalorder %s45, %s61
      %p63 = scmp.eq.s32.totalorder %s23, 0
      %p64 = por %p62, %p63
      %s65 = ssub.s32 %s24, %s36
      %s66 = ssub.s32 %s25, %s32
      %s67 = sor.u32 %s65, %s66
      %p68 = scmp.eq.s32.totalorder %s67, 0
      %s70 = sadd.s32 %s69, 1
      %s71 = scalar_select %p68, %s69, %s70
      %p74 = pneg %p68
      %p75 = scmp.eq.s32.totalorder %s17, 1
      %p76 = por %p74, %p75
      %p77 = scmp.ne.s32.totalorder %s69, %s72
      %p78 = scmp.eq.s32.totalorder %s17, 0
      %p79 = por %p77, %p78
      %p80 = scmp.ne.s32.totalorder %s69, %s72
      %p81 = scmp.eq.s32.totalorder %s22, 1
      %p82 = por %p80, %p81
      %p83 = scmp.ne.s32.totalorder %s72, %s73
      %p84 = scmp.eq.s32.totalorder %s22, 0
      %p85 = por %p83, %p84
      %p86 = scmp.ne.s32.totalorder %s72, %s73
      %p87 = scmp.eq.s32.totalorder %s23, 1
      %p88 = por %p86, %p87
      %p90 = scmp.ne.s32.totalorder %s73, %s89
      %p91 = scmp.eq.s32.totalorder %s23, 0
      %p92 = por %p90, %p91
      %s93 = ssub.s32 %s24, %s36
      %p94 = scmp.eq.s32.totalorder %s93, 0
      %s96 = sadd.s32 %s95, 1
      %s97 = scalar_select %p94, %s95, %s96
      %p100 = pneg %p94
      %p101 = scmp.eq.s32.totalorder %s17, 1
      %p102 = por %p100, %p101
      %p103 = scmp.ne.s32.totalorder %s95, %s98
      %p104 = scmp.eq.s32.totalorder %s17, 0
      %p105 = por %p103, %p104
      %p106 = scmp.ne.s32.totalorder %s95, %s98
      %p107 = scmp.eq.s32.totalorder %s22, 1
      %p108 = por %p106, %p107
      %p109 = scmp.ne.s32.totalorder %s98, %s99
      %p110 = scmp.eq.s32.totalorder %s22, 0
      %p111 = por %p109, %p110
      %p112 = scmp.ne.s32.totalorder %s98, %s99
      %p113 = scmp.eq.s32.totalorder %s23, 1
      %p114 = por %p112, %p113
      %p116 = scmp.ne.s32.totalorder %s99, %s115
      %p117 = scmp.eq.s32.totalorder %s23, 0
      %p118 = por %p116, %p117
      %p119 = scmp.le.s32.totalorder 1, %s17
      %p120 = scmp.lt.s32.totalorder %s17, 3
      %p121 = pnand %p119, %p120
      %p122 = pneg %p121
      // Predicated region
      $region9: #{tpu_custom_call.1} parent=5 // pred_check
        _
      $region10: #{tpu_custom_call.1} parent=5 // pred_check_branch
        %124 = sbr.rel (%p121) target = $region12
      $region11: #{tpu_custom_call.1} parent=5 // pred_region
        %s125 = ssub.s32 %s17, 1
      $region12: #{tpu_custom_call.1} parent=5 // pred_fallthru
        _
      %p126 = scmp.lt.s32.totalorder %s17, 2
      // Predicated region
      $region13: #{tpu_custom_call.1} parent=5 // pred_check
        %p127 = pneg %p126
      $region14: #{tpu_custom_call.1} parent=5 // pred_check_branch
        %129 = sbr.rel (%p127) target = $region16
      $region15: #{tpu_custom_call.1} parent=5 // pred_region
        // Predicated region
        $region17: #{tpu_custom_call.1} parent=15 // pred_check
          %p130 = pneg %p51
        $region18: #{tpu_custom_call.1} parent=15 // pred_check_branch
          %132 = sbr.rel (%p130) target = $region20
        $region19: #{tpu_custom_call.1} parent=15 // pred_region
          %s133 = sand.u32 %s41, 1
          %s134 = scalar_lea.sflag [#allocation3], %s133
          %s135 = sand.u32 %s41, 1
          %s136 = smul.addr %s135, 16
          %s137 = scalar_lea.vmem [#allocation2], %s136
          %s138 = smul.u32 4, %s25
          %s140 = ssub.s32 256, 256
          %141 = vsyncadd %s134, %s140
          %s142 = smul.addr %s24, 4
          %s143 = sadd.s32 %s138, %s142
          %s144 = smul.addr %s143, 64
          %s145 = scalar_lea.hbm %s0, %s144
          %s147 = sshll.u32 %s137, 4
          %s148 = int_to_ptr.vmem [resolvable:$true] %s147
          %150 = dma.hbm_to_vmem [thread:$0]  %s145, 256, %s148, %s134
        $region20: #{tpu_custom_call.1} parent=15 // pred_fallthru
          _
        // Predicated region
        $region21: #{tpu_custom_call.1} parent=15 // pred_check
          %p151 = pneg %p79
        $region22: #{tpu_custom_call.1} parent=15 // pred_check_branch
          %153 = sbr.rel (%p151) target = $region24
        $region23: #{tpu_custom_call.1} parent=15 // pred_region
          %s154 = sand.u32 %s69, 1
          %s155 = scalar_lea.sflag [#allocation6], %s154
          %s156 = sand.u32 %s69, 1
          %s157 = smul.addr %s156, 16
          %s158 = scalar_lea.vmem [#allocation5], %s157
          %s159 = smul.u32 4, %s25
          %s161 = ssub.s32 256, 256
          %162 = vsyncadd %s155, %s161
          %s163 = smul.addr %s24, 4
          %s164 = sadd.s32 %s159, %s163
          %s165 = smul.addr %s164, 64
          %s166 = scalar_lea.hbm %s1, %s165
          %s168 = sshll.u32 %s158, 4
          %s169 = int_to_ptr.vmem [resolvable:$true] %s168
          %171 = dma.hbm_to_vmem [thread:$0]  %s166, 256, %s169, %s155
        $region24: #{tpu_custom_call.1} parent=15 // pred_fallthru
          _
      $region16: #{tpu_custom_call.1} parent=5 // pred_fallthru
        _
      %p172 = scmp.le.s32.totalorder 1, %s17
      %p173 = scmp.lt.s32.totalorder %s17, 3
      %p174 = pnand %p172, %p173
      %p175 = pneg %p174
      // Predicated region
      $region25: #{tpu_custom_call.1} parent=5 // pred_check
        _
      $region26: #{tpu_custom_call.1} parent=5 // pred_check_branch
        %177 = sbr.rel (%p174) target = $region28
      $region27: #{tpu_custom_call.1} parent=5 // pred_region
        %s178 = ssub.s32 %s17, 1
        %s179 = sand.u32 %s44, 1
        %s180 = scalar_lea.sflag [#allocation3], %s179
        %s181 = sand.u32 %s44, 1
        %s182 = smul.addr %s181, 16
        %s183 = scalar_lea.vmem [#allocation2], %s182
        // Predicated region
        $region29: #{tpu_custom_call.1} parent=27 // pred_check
          %p184 = pneg %p57
        $region30: #{tpu_custom_call.1} parent=27 // pred_check_branch
          %186 = sbr.rel (%p184) target = $region32
        $region31: #{tpu_custom_call.1} parent=27 // pred_region
          %187 = dma.done %s180, 256
        $region32: #{tpu_custom_call.1} parent=27 // pred_fallthru
          _
        %s188 = sand.u32 %s72, 1
        %s189 = scalar_lea.sflag [#allocation6], %s188
        %s190 = sand.u32 %s72, 1
        %s191 = smul.addr %s190, 16
        %s192 = scalar_lea.vmem [#allocation5], %s191
        // Predicated region
        $region33: #{tpu_custom_call.1} parent=27 // pred_check
          %p193 = pneg %p85
        $region34: #{tpu_custom_call.1} parent=27 // pred_check_branch
          %195 = sbr.rel (%p193) target = $region36
        $region35: #{tpu_custom_call.1} parent=27 // pred_region
          %196 = dma.done %s189, 256
        $region36: #{tpu_custom_call.1} parent=27 // pred_fallthru
          _
        %s197 = sand.u32 %s44, 1
        %s198 = scalar_lea.sflag [#allocation3], %s197
        %s199 = sand.u32 %s44, 1
        %s200 = smul.addr %s199, 16
        %s201 = scalar_lea.vmem [#allocation2], %s200
        %p202 = pneg %p57
        %p203 = pneg %p54
        %s204 = sand.u32 %s72, 1
        %s205 = scalar_lea.sflag [#allocation6], %s204
        %s206 = sand.u32 %s72, 1
        %s207 = smul.addr %s206, 16
        %s208 = scalar_lea.vmem [#allocation5], %s207
        %p209 = pneg %p85
        %p210 = pneg %p82
        %p211 = pneg %p111
        %p212 = pneg %p108
        %s213 = sand.u32 %s98, 1
        %s214 = scalar_lea.sflag [#allocation4], %s213
        %s215 = sand.u32 %s98, 1
        %s216 = smul.addr %s215, 4
        %s217 = scalar_lea.vmem [#allocation7], %s216
        %s218 = smul.u32 4, %s27
        %s219 = smul.u32 4, %s27
        %p220 = scmp.eq.s32.totalorder %s27, 0
        // Predicated region
        $region37: #{tpu_custom_call.1} parent=27 // pred_check
          %p221 = pneg %p220
        $region38: #{tpu_custom_call.1} parent=27 // pred_check_branch
          %223 = sbr.rel (%p221) target = $region40
        $region39: #{tpu_custom_call.1} parent=27 // pred_region
          %v224 = vlaneseq
          %vm225 = vcmp.ge.s32.totalorder %v224, 0
          %vm226 = vcmp.lt.s32.totalorder %v224, 512
          %vm227 = vmand %vm225, %vm226
          %228 = vst.msk [vmem:[%s217] sm:$0xf] %vm227, 0.0
        $region40: #{tpu_custom_call.1} parent=27 // pred_fallthru
          _
        %v229 = vld [vmem:[%s183] sm:$0xff]
        %v230 = vld [vmem:[%s183 + $0x8] sm:$0xff]
        %v233 = vcombine.high %v229, %v229
        %v234 = vcombine.high %v230, %v230
        %vm237 = vcmask 1043456
        %v238 = vsel %vm237, %v229, -inf
        %v239 = vrot.slane %v238, 4
        %v240 = vmax.f32 %v238, %v239
        %v241 = vrot.slane %v240, 2
        %v242 = vmax.f32 %v240, %v241
        %v243 = vrot.slane %v242, 1
        %v244 = vmax.f32 %v242, %v243
        %v245 = vsel %vm237, %v233, -inf
        %v246 = vrot.slane %v245, 4
        %v247 = vmax.f32 %v245, %v246
        %v248 = vrot.slane %v247, 2
        %v249 = vmax.f32 %v247, %v248
        %v250 = vrot.slane %v249, 1
        %v251 = vmax.f32 %v249, %v250
        %v252 = vsel %vm237, %v230, -inf
        %v253 = vrot.slane %v252, 4
        %v254 = vmax.f32 %v252, %v253
        %v255 = vrot.slane %v254, 2
        %v256 = vmax.f32 %v254, %v255
        %v257 = vrot.slane %v256, 1
        %v258 = vmax.f32 %v256, %v257
        %v259 = vsel %vm237, %v234, -inf
        %v260 = vrot.slane %v259, 4
        %v261 = vmax.f32 %v259, %v260
        %v262 = vrot.slane %v261, 2
        %v263 = vmax.f32 %v261, %v262
        %v264 = vrot.slane %v263, 1
        %v265 = vmax.f32 %v263, %v264
        %v270 = vcombine.low %v244, %v251
        %v271 = vcombine.low %v258, %v265
        %v274 = vsub.f32 %v229, %v270
        %v275 = vsub.f32 %v230, %v271
        %v276 = vmul.f32 %v274, 1.442695
        %v277 = vpow.pop %v276
        %v278 = vmul.f32 %v275, 1.442695
        %v279 = vpow.pop %v278
        %v282 = vcombine.high %v277, %v277
        %v283 = vcombine.high %v279, %v279
        %v286 = vsel %vm237, %v277, 0.0
        %v287 = vrot.slane %v286, 4
        %v288 = vadd.f32 %v286, %v287
        %v289 = vrot.slane %v288, 2
        %v290 = vadd.f32 %v288, %v289
        %v291 = vrot.slane %v290, 1
        %v292 = vadd.f32 %v290, %v291
        %v293 = vsel %vm237, %v282, 0.0
        %v294 = vrot.slane %v293, 4
        %v295 = vadd.f32 %v293, %v294
        %v296 = vrot.slane %v295, 2
        %v297 = vadd.f32 %v295, %v296
        %v298 = vrot.slane %v297, 1
        %v299 = vadd.f32 %v297, %v298
        %v300 = vsel %vm237, %v279, 0.0
        %v301 = vrot.slane %v300, 4
        %v302 = vadd.f32 %v300, %v301
        %v303 = vrot.slane %v302, 2
        %v304 = vadd.f32 %v302, %v303
        %v305 = vrot.slane %v304, 1
        %v306 = vadd.f32 %v304, %v305
        %v307 = vsel %vm237, %v283, 0.0
        %v308 = vrot.slane %v307, 4
        %v309 = vadd.f32 %v307, %v308
        %v310 = vrot.slane %v309, 2
        %v311 = vadd.f32 %v309, %v310
        %v312 = vrot.slane %v311, 1
        %v313 = vadd.f32 %v311, %v312
        %v314 = vld [vmem:[%s192] sm:$0xff]
        %v315 = vld [vmem:[%s192 + $0x8] sm:$0xff]
        %v316 = vmul.f32 %v277, %v314
        %v317 = vmul.f32 %v279, %v315
        %v320 = vcombine.high %v316, %v316
        %v321 = vcombine.high %v317, %v317
        %v322 = vrot.slane %v316, 1
        %v323 = vrot.slane %v320, 1
        %v324 = vrot.slane %v317, 1
        %v325 = vrot.slane %v321, 1
        %vm330 = vcmask 1042432
        %v331 = vsel %vm330, %v322, 0.0
        %v332 = vrot.slane %v331, 4
        %v333 = vadd.f32 %v331, %v332
        %v334 = vrot.slane %v333, 2
        %v335 = vadd.f32 %v333, %v334
        %v336 = vrot.slane %v335, 1
        %v337 = vadd.f32 %v335, %v336
        %v338 = vsel %vm330, %v323, 0.0
        %v339 = vrot.slane %v338, 4
        %v340 = vadd.f32 %v338, %v339
        %v341 = vrot.slane %v340, 2
        %v342 = vadd.f32 %v340, %v341
        %v343 = vrot.slane %v342, 1
        %v344 = vadd.f32 %v342, %v343
        %v345 = vsel %vm330, %v324, 0.0
        %v346 = vrot.slane %v345, 4
        %v347 = vadd.f32 %v345, %v346
        %v348 = vrot.slane %v347, 2
        %v349 = vadd.f32 %v347, %v348
        %v350 = vrot.slane %v349, 1
        %v351 = vadd.f32 %v349, %v350
        %v352 = vsel %vm330, %v325, 0.0
        %v353 = vrot.slane %v352, 4
        %v354 = vadd.f32 %v352, %v353
        %v355 = vrot.slane %v354, 2
        %v356 = vadd.f32 %v354, %v355
        %v357 = vrot.slane %v356, 1
        %v358 = vadd.f32 %v356, %v357
        %v359 = vld [vmem:[%s217] sm:$0xf]
        %v360 = vrcp.pop %v292
        %v361 = vmul.f32 %v337, %v360
        %v362 = vrcp.pop %v299
        %v363 = vmul.f32 %v344, %v362
        %v364 = vrcp.pop %v306
        %v365 = vmul.f32 %v351, %v364
        %v366 = vrcp.pop %v313
        %v367 = vmul.f32 %v358, %v366
        %v372 = vcombine.low %v361, %v363
        %v373 = vcombine.low %v365, %v367
        %v375 = vunpack.c.l.s4 1966171168
        %v376 = vunpack.c.0.s8 %v375
        %v377 = vlaneseq
        %v378 = vshrl.u32 %v377, 7
        %v379 = vsub.s32 %v376, %v378
        %v380 = vrot.slane %v372, %v379
        %v382 = vunpack.c.l.s4 1966171168
        %v383 = vunpack.c.0.s8 %v382
        %v384 = vlaneseq
        %v385 = vshrl.u32 %v384, 7
        %v386 = vsub.s32 %v383, %v385
        %v387 = vrot.slane %v373, %v386
        %v388 = vcombine.low %v380, %v387
        %v390 = vunpack.c.l.s4 1966171168
        %v391 = vunpack.c.0.s8 %v390
        %v392 = vlaneseq
        %v393 = vshrl.u32 %v392, 7
        %v394 = vsub.s32 %v391, %v393
        %v395 = vrot.slane %v388, %v394
        %v397 = vadd.f32 %v359, %v395
        %v398 = vlaneseq
        %vm399 = vcmp.ge.s32.totalorder %v398, 0
        %vm400 = vcmp.lt.s32.totalorder %v398, 512
        %vm401 = vmand %vm399, %vm400
        %402 = vst.msk [vmem:[%s217] sm:$0xf] %vm401, %v397
        %s403 = sand.u32 %s98, 1
        %s404 = scalar_lea.sflag [#allocation4], %s403
        %s405 = sand.u32 %s98, 1
        %s406 = smul.addr %s405, 4
        %s407 = scalar_lea.vmem [#allocation7], %s406
        // Predicated region
        $region41: #{tpu_custom_call.1} parent=27 // pred_check
          %p408 = pneg %p108
        $region42: #{tpu_custom_call.1} parent=27 // pred_check_branch
          %410 = sbr.rel (%p408) target = $region44
        $region43: #{tpu_custom_call.1} parent=27 // pred_region
          %s412 = ssub.s32 64, 64
          %413 = vsyncadd %s404, %s412
          %s414 = smul.addr %s26, 4
          %s415 = smul.addr %s414, 16
          %s416 = scalar_lea.hbm %s2, %s415
          %s418 = sshll.u32 %s407, 4
          %s419 = int_to_ptr.vmem [resolvable:$true] %s418
          %421 = dma.vmem_to_hbm [thread:$0]  %s419, 64, %s416, %s404
        $region44: #{tpu_custom_call.1} parent=27 // pred_fallthru
          _
      $region28: #{tpu_custom_call.1} parent=5 // pred_fallthru
        _
      %p422 = scmp.le.s32.totalorder 2, %s17
      // Predicated region
      $region45: #{tpu_custom_call.1} parent=5 // pred_check
        %p423 = pneg %p422
      $region46: #{tpu_custom_call.1} parent=5 // pred_check_branch
        %425 = sbr.rel (%p423) target = $region48
      $region47: #{tpu_custom_call.1} parent=5 // pred_region
        %s426 = ssub.s32 %s17, 2
        // Predicated region
        $region49: #{tpu_custom_call.1} parent=47 // pred_check
          %p427 = pneg %p114
        $region50: #{tpu_custom_call.1} parent=47 // pred_check_branch
          %429 = sbr.rel (%p427) target = $region52
        $region51: #{tpu_custom_call.1} parent=47 // pred_region
          %s430 = sand.u32 %s99, 1
          %s431 = scalar_lea.sflag [#allocation4], %s430
          %s432 = sand.u32 %s99, 1
          %s433 = smul.addr %s432, 4
          %s434 = scalar_lea.vmem [#allocation7], %s433
          %435 = dma.done %s431, 64
        $region52: #{tpu_custom_call.1} parent=47 // pred_fallthru
          _
      $region48: #{tpu_custom_call.1} parent=5 // pred_fallthru
        _
    $region6: #{tpu_custom_call.1} parent=1 // loop_footer
      %s21 = sadd.s32 1, %s17
    $region7: #{tpu_custom_call.1} parent=1 // loop_footer_branch
      %16 = sbr.rel target = $region3
    $region8: #{tpu_custom_call.1} parent=1 // loop_exit
      _
    %436 = vsyncpa [#allocation3], 1
    %s437 = scalar_lea.sflag [#allocation3], 1
    %438 = vsyncpa %s437, 1
    %439 = vsyncpa [#allocation6], 1
    %s440 = scalar_lea.sflag [#allocation6], 1
    %441 = vsyncpa %s440, 1
    %442 = vsyncpa [#allocation4], 1
    %s443 = scalar_lea.sflag [#allocation4], 1
    %444 = vsyncpa %s443, 1

</llo_original>
